<compile_context>
chip_gen: v6e
topology: v6e:2x2x1
jax: 0.10.0
libtpu: 0.0.40
codegen_flags: <defaults>
</compile_context>

<pallas_src>
import functools
import math

import jax
import jax.numpy as jnp
from jax.experimental import pallas as pl
from jax.experimental.pallas import tpu as pltpu

_LANE = 128          # lane width
_SUBLANE = 8         # sublane width
_SQRT_2_OVER_PI = math.sqrt(2.0 / math.pi)
_MXU_THRESHOLD = 8   # use the MXU only if any feature dim exceeds this


def _round_up(x, m):
    return ((x + m - 1) // m) * m


def _gelu(x):
    # GELU (tanh approximation) exactly as in the PyTorch module.
    x3 = x * x * x
    return 0.5 * x * (1.0 + jnp.tanh(_SQRT_2_OVER_PI * (x + 0.044715 * x3)))


def _deep_nn_kernel(x_ref, w_ref, b_ref, o_ref, *,
                    in_sizes, shortcut_flags, use_mxu):
    """Whole forward pass in one gridless kernel (static unroll over layers).

    x_ref: (B_pad, F_PAD)                    activations (f32)
    w_ref: (L, 8, F_PAD) f32   [VPU path]    per-layer weights, (in, out)
           (L, F_PAD, F_PAD) bf16 [MXU path]
    b_ref: (L, F_PAD)                        per-layer biases (lane-dense, f32)
    o_ref: (B_pad, F_PAD)                    output (f32)
    """
    x = x_ref[...]
    for i in range(len(in_sizes)):
        b_i = b_ref[i:i + 1, :]                       # (1, F_PAD)
        if use_mxu:
            w_i = w_ref[i]                            # (F_PAD, F_PAD) bf16
            y = jnp.dot(x.astype(w_i.dtype), w_i,
                        preferred_element_type=jnp.float32) + b_i
        else:
            # Tiny contraction: <=8 VPU FMAs instead of a zero-padded MXU
            # pass.  Slice the Ref per row (static slice -> exactly one vreg
            # load per term; the full tile is never materialized).
            y = jnp.broadcast_to(b_i, x.shape)
            for k in range(in_sizes[i]):
                w_row = w_ref[i, k:k + 1, :]          # (1, F_PAD), 1 vreg
                y = y + x[:, k:k + 1] * w_row
        y = _gelu(y)
        x = x + y if shortcut_flags[i] else y         # static decision
    o_ref[...] = x


def pack_params(weights, biases):
    """One-time packing of parameters into padded, stacked TPU-friendly arrays.

    weights[i]: (out, in) like nn.Linear;  biases[i]: (out,).

    Returns:
      w_stack: (L, 8, F_PAD) f32    when all feature sizes <= _MXU_THRESHOLD
               (L, F_PAD, F_PAD) bf16 otherwise (MXU fallback, bf16-native on
               v6e/v7x, f32 accumulation in the kernel)
      b_stack: (L, F_PAD) f32
    """
    max_feat = max(max(w.shape) for w in weights)
    f_pad = max(_LANE, _round_up(max_feat, _LANE))
    use_mxu = max_feat > _MXU_THRESHOLD
    row_pad = f_pad if use_mxu else _SUBLANE
    w_dtype = jnp.bfloat16 if use_mxu else jnp.float32

    w_stack = jnp.stack([
        jnp.pad(w.T.astype(w_dtype),
                ((0, row_pad - w.shape[1]), (0, f_pad - w.shape[0])))
        for w in weights
    ])
    b_stack = jnp.stack([
        jnp.pad(b.astype(jnp.float32), (0, f_pad - b.shape[0]))
        for b in biases
    ])
    return w_stack, b_stack


@functools.partial(jax.jit, static_argnames=("layer_sizes", "use_shortcut"))
def example_deep_nn_forward(x, w_stack, b_stack, layer_sizes, use_shortcut):
    """x: (B, layer_sizes[0]) f32.  w_stack/b_stack: from pack_params()."""
    layer_sizes = tuple(int(s) for s in layer_sizes)
    n_layers = len(layer_sizes) - 1
    B = x.shape[0]
    b_pad = max(_SUBLANE, _round_up(B, _SUBLANE))

    # Static facts derived from the packed-parameter shapes.
    f_pad = int(w_stack.shape[2])
    use_mxu = int(w_stack.shape[1]) > _SUBLANE

    # Single fused pad of the activations (only per-call glue).
    x_pad = jnp.pad(x.astype(jnp.float32),
                    ((0, b_pad - B), (0, f_pad - layer_sizes[0])))

    # Shortcut condition depends on the ORIGINAL (unpadded) shapes -> static.
    shortcut_flags = tuple(
        bool(use_shortcut) and (layer_sizes[i] == layer_sizes[i + 1])
        for i in range(n_layers)
    )
    in_sizes = tuple(layer_sizes[:-1])

    kernel = functools.partial(
        _deep_nn_kernel,
        in_sizes=in_sizes,
        shortcut_flags=shortcut_flags,
        use_mxu=use_mxu,
    )

    # Scheduling hint: FMAs + GELU elementwise, one tanh per output element
    # per layer, and one pass over every operand byte.
    flops = sum(2 * b_pad * in_sizes[i] * f_pad + 10 * b_pad * f_pad
                for i in range(n_layers))
    transcendentals = n_layers * b_pad * f_pad
    bytes_accessed = (x_pad.size * 4 + w_stack.size * w_stack.dtype.itemsize
                      + b_stack.size * 4 + b_pad * f_pad * 4)
    cost = pl.CostEstimate(flops=flops, transcendentals=transcendentals,
                           bytes_accessed=bytes_accessed)

    # Gridless: the whole problem is one VMEM-resident block.  Full-array
    # BlockSpecs with an explicit VMEM memory space document / guarantee the
    # placement.
    vmem_spec = pl.BlockSpec(memory_space=pltpu.MemorySpace.VMEM)
    out_pad = pl.pallas_call(
        kernel,
        out_shape=jax.ShapeDtypeStruct((b_pad, f_pad), jnp.float32),
        in_specs=[vmem_spec, vmem_spec, vmem_spec],
        out_specs=vmem_spec,
        cost_estimate=cost,
    )(x_pad, w_stack, b_stack)

    return out_pad[:B, :layer_sizes[-1]]


def _reference_forward(x, weights, biases, use_shortcut):
    """Pure-JAX reference mirroring the PyTorch forward."""
    for i in range(len(weights)):
        y = _gelu(x @ weights[i].T + biases[i])
        if use_shortcut and x.shape == y.shape:
            x = x + y
        else:
            x = y
    return x


if __name__ == "__main__":
    layer_sizes = (3, 3, 3, 3, 3, 1)
    use_shortcut = True
    B = 2

    key = jax.random.PRNGKey(0)
    keys = jax.random.split(key, 2 * (len(layer_sizes) - 1) + 1)

    # Deterministic PyTorch-style init: uniform(-1/sqrt(fan_in), +1/sqrt(fan_in)).
    weights, biases = [], []
    for i in range(len(layer_sizes) - 1):
        fin, fout = layer_sizes[i], layer_sizes[i + 1]
        bound = 1.0 / math.sqrt(fin)
        w = jax.random.uniform(keys[2 * i], (fout, fin), jnp.float32, -bound, bound)
        b = jax.random.uniform(keys[2 * i + 1], (fout,), jnp.float32, -bound, bound)
        weights.append(w)
        biases.append(b)

    x = jax.random.uniform(keys[-1], (B, layer_sizes[0]), jnp.float32)

    # Pack parameters ONCE (hoisted out of the per-call path).
    w_stack, b_stack = pack_params(weights, biases)
    w_stack = jax.block_until_ready(w_stack)
    b_stack = jax.block_until_ready(b_stack)
    assert w_stack.shape == (5, _SUBLANE, _LANE), w_stack.shape  # VPU-path packing

    out = example_deep_nn_forward(x, w_stack, b_stack, layer_sizes, use_shortcut)
    out = jax.block_until_ready(out)

    ref = _reference_forward(x, weights, biases, use_shortcut)
    assert out.shape == (B, layer_sizes[-1]), out.shape
    assert jnp.allclose(out, ref, atol=1e-5, rtol=1e-5), (out, ref)

    print("KERNEL_OK")
</pallas_src>

<mosaic_0001>
module attributes {stable_mosaic.version = 11 : i64} {
  func.func @_deep_nn_kernel(%arg0: memref<8x128xf32, #tpu.memory_space<vmem>>, %arg1: memref<5x8x128xf32, #tpu.memory_space<vmem>>, %arg2: memref<5x128xf32, #tpu.memory_space<vmem>>, %arg3: memref<8x128xf32, #tpu.memory_space<vmem>>) attributes {dimension_semantics = [], scalar_prefetch = 0 : i64, scratch_operands = 0 : i64, tpu.core_type = #tpu.core_type<tc>} {
    %c0 = arith.constant 0 : index
    %c0_0 = arith.constant 0 : index
    %0 = vector.load %arg0[%c0, %c0_0] : memref<8x128xf32, #tpu.memory_space<vmem>>, vector<8x128xf32>
    %c0_1 = arith.constant 0 : index
    %c0_2 = arith.constant 0 : index
    %1 = vector.load %arg2[%c0_1, %c0_2] : memref<5x128xf32, #tpu.memory_space<vmem>>, vector<1x128xf32>
    %2 = vector.shape_cast %1 : vector<1x128xf32> to vector<1x128xf32>
    %3 = vector.broadcast %2 : vector<1x128xf32> to vector<8x128xf32>
    %c0_3 = arith.constant 0 : index
    %c0_4 = arith.constant 0 : index
    %c0_5 = arith.constant 0 : index
    %4 = vector.load %arg1[%c0_3, %c0_4, %c0_5] : memref<5x8x128xf32, #tpu.memory_space<vmem>>, vector<1x1x128xf32>
    %5 = vector.shape_cast %4 : vector<1x1x128xf32> to vector<1x128xf32>
    %6 = vector.extract_strided_slice %0 {offsets = [0, 0], sizes = [8, 1], strides = [1, 1]} : vector<8x128xf32> to vector<8x1xf32>
    %7 = vector.broadcast %6 : vector<8x1xf32> to vector<8x128xf32>
    %8 = vector.broadcast %5 : vector<1x128xf32> to vector<8x128xf32>
    %9 = arith.mulf %7, %8 : vector<8x128xf32>
    %10 = arith.addf %3, %9 : vector<8x128xf32>
    %c0_6 = arith.constant 0 : index
    %c1 = arith.constant 1 : index
    %c0_7 = arith.constant 0 : index
    %11 = vector.load %arg1[%c0_6, %c1, %c0_7] : memref<5x8x128xf32, #tpu.memory_space<vmem>>, vector<1x1x128xf32>
    %12 = vector.shape_cast %11 : vector<1x1x128xf32> to vector<1x128xf32>
    %13 = vector.extract_strided_slice %0 {offsets = [0, 1], sizes = [8, 1], strides = [1, 1]} : vector<8x128xf32> to vector<8x1xf32>
    %14 = vector.broadcast %13 : vector<8x1xf32> to vector<8x128xf32>
    %15 = vector.broadcast %12 : vector<1x128xf32> to vector<8x128xf32>
    %16 = arith.mulf %14, %15 : vector<8x128xf32>
    %17 = arith.addf %10, %16 : vector<8x128xf32>
    %c0_8 = arith.constant 0 : index
    %c2 = arith.constant 2 : index
    %c0_9 = arith.constant 0 : index
    %18 = vector.load %arg1[%c0_8, %c2, %c0_9] : memref<5x8x128xf32, #tpu.memory_space<vmem>>, vector<1x1x128xf32>
    %19 = vector.shape_cast %18 : vector<1x1x128xf32> to vector<1x128xf32>
    %20 = vector.extract_strided_slice %0 {offsets = [0, 2], sizes = [8, 1], strides = [1, 1]} : vector<8x128xf32> to vector<8x1xf32>
    %21 = vector.broadcast %20 : vector<8x1xf32> to vector<8x128xf32>
    %22 = vector.broadcast %19 : vector<1x128xf32> to vector<8x128xf32>
    %23 = arith.mulf %21, %22 : vector<8x128xf32>
    %24 = arith.addf %17, %23 : vector<8x128xf32>
    %25 = arith.mulf %24, %24 : vector<8x128xf32>
    %26 = arith.mulf %25, %24 : vector<8x128xf32>
    %cst = arith.constant 5.000000e-01 : f32
    %27 = vector.broadcast %cst : f32 to vector<8x128xf32>
    %28 = arith.mulf %27, %24 : vector<8x128xf32>
    %cst_10 = arith.constant 4.471500e-02 : f32
    %29 = vector.broadcast %cst_10 : f32 to vector<8x128xf32>
    %30 = arith.mulf %29, %26 : vector<8x128xf32>
    %31 = arith.addf %24, %30 : vector<8x128xf32>
    %cst_11 = arith.constant 0.797884583 : f32
    %32 = vector.broadcast %cst_11 : f32 to vector<8x128xf32>
    %33 = arith.mulf %32, %31 : vector<8x128xf32>
    %34 = math.tanh %33 : vector<8x128xf32>
    %cst_12 = arith.constant 1.000000e+00 : f32
    %35 = vector.broadcast %cst_12 : f32 to vector<8x128xf32>
    %36 = arith.addf %35, %34 : vector<8x128xf32>
    %37 = arith.mulf %28, %36 : vector<8x128xf32>
    %38 = arith.addf %0, %37 : vector<8x128xf32>
    %c1_13 = arith.constant 1 : index
    %c0_14 = arith.constant 0 : index
    %39 = vector.load %arg2[%c1_13, %c0_14] : memref<5x128xf32, #tpu.memory_space<vmem>>, vector<1x128xf32>
    %40 = vector.shape_cast %39 : vector<1x128xf32> to vector<1x128xf32>
    %41 = vector.broadcast %40 : vector<1x128xf32> to vector<8x128xf32>
    %c1_15 = arith.constant 1 : index
    %c0_16 = arith.constant 0 : index
    %c0_17 = arith.constant 0 : index
    %42 = vector.load %arg1[%c1_15, %c0_16, %c0_17] : memref<5x8x128xf32, #tpu.memory_space<vmem>>, vector<1x1x128xf32>
    %43 = vector.shape_cast %42 : vector<1x1x128xf32> to vector<1x128xf32>
    %44 = vector.extract_strided_slice %38 {offsets = [0, 0], sizes = [8, 1], strides = [1, 1]} : vector<8x128xf32> to vector<8x1xf32>
    %45 = vector.broadcast %44 : vector<8x1xf32> to vector<8x128xf32>
    %46 = vector.broadcast %43 : vector<1x128xf32> to vector<8x128xf32>
    %47 = arith.mulf %45, %46 : vector<8x128xf32>
    %48 = arith.addf %41, %47 : vector<8x128xf32>
    %c1_18 = arith.constant 1 : index
    %c1_19 = arith.constant 1 : index
    %c0_20 = arith.constant 0 : index
    %49 = vector.load %arg1[%c1_18, %c1_19, %c0_20] : memref<5x8x128xf32, #tpu.memory_space<vmem>>, vector<1x1x128xf32>
    %50 = vector.shape_cast %49 : vector<1x1x128xf32> to vector<1x128xf32>
    %51 = vector.extract_strided_slice %38 {offsets = [0, 1], sizes = [8, 1], strides = [1, 1]} : vector<8x128xf32> to vector<8x1xf32>
    %52 = vector.broadcast %51 : vector<8x1xf32> to vector<8x128xf32>
    %53 = vector.broadcast %50 : vector<1x128xf32> to vector<8x128xf32>
    %54 = arith.mulf %52, %53 : vector<8x128xf32>
    %55 = arith.addf %48, %54 : vector<8x128xf32>
    %c1_21 = arith.constant 1 : index
    %c2_22 = arith.constant 2 : index
    %c0_23 = arith.constant 0 : index
    %56 = vector.load %arg1[%c1_21, %c2_22, %c0_23] : memref<5x8x128xf32, #tpu.memory_space<vmem>>, vector<1x1x128xf32>
    %57 = vector.shape_cast %56 : vector<1x1x128xf32> to vector<1x128xf32>
    %58 = vector.extract_strided_slice %38 {offsets = [0, 2], sizes = [8, 1], strides = [1, 1]} : vector<8x128xf32> to vector<8x1xf32>
    %59 = vector.broadcast %58 : vector<8x1xf32> to vector<8x128xf32>
    %60 = vector.broadcast %57 : vector<1x128xf32> to vector<8x128xf32>
    %61 = arith.mulf %59, %60 : vector<8x128xf32>
    %62 = arith.addf %55, %61 : vector<8x128xf32>
    %63 = arith.mulf %62, %62 : vector<8x128xf32>
    %64 = arith.mulf %63, %62 : vector<8x128xf32>
    %cst_24 = arith.constant 5.000000e-01 : f32
    %65 = vector.broadcast %cst_24 : f32 to vector<8x128xf32>
    %66 = arith.mulf %65, %62 : vector<8x128xf32>
    %cst_25 = arith.constant 4.471500e-02 : f32
    %67 = vector.broadcast %cst_25 : f32 to vector<8x128xf32>
    %68 = arith.mulf %67, %64 : vector<8x128xf32>
    %69 = arith.addf %62, %68 : vector<8x128xf32>
    %cst_26 = arith.constant 0.797884583 : f32
    %70 = vector.broadcast %cst_26 : f32 to vector<8x128xf32>
    %71 = arith.mulf %70, %69 : vector<8x128xf32>
    %72 = math.tanh %71 : vector<8x128xf32>
    %cst_27 = arith.constant 1.000000e+00 : f32
    %73 = vector.broadcast %cst_27 : f32 to vector<8x128xf32>
    %74 = arith.addf %73, %72 : vector<8x128xf32>
    %75 = arith.mulf %66, %74 : vector<8x128xf32>
    %76 = arith.addf %38, %75 : vector<8x128xf32>
    %c2_28 = arith.constant 2 : index
    %c0_29 = arith.constant 0 : index
    %77 = vector.load %arg2[%c2_28, %c0_29] : memref<5x128xf32, #tpu.memory_space<vmem>>, vector<1x128xf32>
    %78 = vector.shape_cast %77 : vector<1x128xf32> to vector<1x128xf32>
    %79 = vector.broadcast %78 : vector<1x128xf32> to vector<8x128xf32>
    %c2_30 = arith.constant 2 : index
    %c0_31 = arith.constant 0 : index
    %c0_32 = arith.constant 0 : index
    %80 = vector.load %arg1[%c2_30, %c0_31, %c0_32] : memref<5x8x128xf32, #tpu.memory_space<vmem>>, vector<1x1x128xf32>
    %81 = vector.shape_cast %80 : vector<1x1x128xf32> to vector<1x128xf32>
    %82 = vector.extract_strided_slice %76 {offsets = [0, 0], sizes = [8, 1], strides = [1, 1]} : vector<8x128xf32> to vector<8x1xf32>
    %83 = vector.broadcast %82 : vector<8x1xf32> to vector<8x128xf32>
    %84 = vector.broadcast %81 : vector<1x128xf32> to vector<8x128xf32>
    %85 = arith.mulf %83, %84 : vector<8x128xf32>
    %86 = arith.addf %79, %85 : vector<8x128xf32>
    %c2_33 = arith.constant 2 : index
    %c1_34 = arith.constant 1 : index
    %c0_35 = arith.constant 0 : index
    %87 = vector.load %arg1[%c2_33, %c1_34, %c0_35] : memref<5x8x128xf32, #tpu.memory_space<vmem>>, vector<1x1x128xf32>
    %88 = vector.shape_cast %87 : vector<1x1x128xf32> to vector<1x128xf32>
    %89 = vector.extract_strided_slice %76 {offsets = [0, 1], sizes = [8, 1], strides = [1, 1]} : vector<8x128xf32> to vector<8x1xf32>
    %90 = vector.broadcast %89 : vector<8x1xf32> to vector<8x128xf32>
    %91 = vector.broadcast %88 : vector<1x128xf32> to vector<8x128xf32>
    %92 = arith.mulf %90, %91 : vector<8x128xf32>
    %93 = arith.addf %86, %92 : vector<8x128xf32>
    %c2_36 = arith.constant 2 : index
    %c2_37 = arith.constant 2 : index
    %c0_38 = arith.constant 0 : index
    %94 = vector.load %arg1[%c2_36, %c2_37, %c0_38] : memref<5x8x128xf32, #tpu.memory_space<vmem>>, vector<1x1x128xf32>
    %95 = vector.shape_cast %94 : vector<1x1x128xf32> to vector<1x128xf32>
    %96 = vector.extract_strided_slice %76 {offsets = [0, 2], sizes = [8, 1], strides = [1, 1]} : vector<8x128xf32> to vector<8x1xf32>
    %97 = vector.broadcast %96 : vector<8x1xf32> to vector<8x128xf32>
    %98 = vector.broadcast %95 : vector<1x128xf32> to vector<8x128xf32>
    %99 = arith.mulf %97, %98 : vector<8x128xf32>
    %100 = arith.addf %93, %99 : vector<8x128xf32>
    %101 = arith.mulf %100, %100 : vector<8x128xf32>
    %102 = arith.mulf %101, %100 : vector<8x128xf32>
    %cst_39 = arith.constant 5.000000e-01 : f32
    %103 = vector.broadcast %cst_39 : f32 to vector<8x128xf32>
    %104 = arith.mulf %103, %100 : vector<8x128xf32>
    %cst_40 = arith.constant 4.471500e-02 : f32
    %105 = vector.broadcast %cst_40 : f32 to vector<8x128xf32>
    %106 = arith.mulf %105, %102 : vector<8x128xf32>
    %107 = arith.addf %100, %106 : vector<8x128xf32>
    %cst_41 = arith.constant 0.797884583 : f32
    %108 = vector.broadcast %cst_41 : f32 to vector<8x128xf32>
    %109 = arith.mulf %108, %107 : vector<8x128xf32>
    %110 = math.tanh %109 : vector<8x128xf32>
    %cst_42 = arith.constant 1.000000e+00 : f32
    %111 = vector.broadcast %cst_42 : f32 to vector<8x128xf32>
    %112 = arith.addf %111, %110 : vector<8x128xf32>
    %113 = arith.mulf %104, %112 : vector<8x128xf32>
    %114 = arith.addf %76, %113 : vector<8x128xf32>
    %c3 = arith.constant 3 : index
    %c0_43 = arith.constant 0 : index
    %115 = vector.load %arg2[%c3, %c0_43] : memref<5x128xf32, #tpu.memory_space<vmem>>, vector<1x128xf32>
    %116 = vector.shape_cast %115 : vector<1x128xf32> to vector<1x128xf32>
    %117 = vector.broadcast %116 : vector<1x128xf32> to vector<8x128xf32>
    %c3_44 = arith.constant 3 : index
    %c0_45 = arith.constant 0 : index
    %c0_46 = arith.constant 0 : index
    %118 = vector.load %arg1[%c3_44, %c0_45, %c0_46] : memref<5x8x128xf32, #tpu.memory_space<vmem>>, vector<1x1x128xf32>
    %119 = vector.shape_cast %118 : vector<1x1x128xf32> to vector<1x128xf32>
    %120 = vector.extract_strided_slice %114 {offsets = [0, 0], sizes = [8, 1], strides = [1, 1]} : vector<8x128xf32> to vector<8x1xf32>
    %121 = vector.broadcast %120 : vector<8x1xf32> to vector<8x128xf32>
    %122 = vector.broadcast %119 : vector<1x128xf32> to vector<8x128xf32>
    %123 = arith.mulf %121, %122 : vector<8x128xf32>
    %124 = arith.addf %117, %123 : vector<8x128xf32>
    %c3_47 = arith.constant 3 : index
    %c1_48 = arith.constant 1 : index
    %c0_49 = arith.constant 0 : index
    %125 = vector.load %arg1[%c3_47, %c1_48, %c0_49] : memref<5x8x128xf32, #tpu.memory_space<vmem>>, vector<1x1x128xf32>
    %126 = vector.shape_cast %125 : vector<1x1x128xf32> to vector<1x128xf32>
    %127 = vector.extract_strided_slice %114 {offsets = [0, 1], sizes = [8, 1], strides = [1, 1]} : vector<8x128xf32> to vector<8x1xf32>
    %128 = vector.broadcast %127 : vector<8x1xf32> to vector<8x128xf32>
    %129 = vector.broadcast %126 : vector<1x128xf32> to vector<8x128xf32>
    %130 = arith.mulf %128, %129 : vector<8x128xf32>
    %131 = arith.addf %124, %130 : vector<8x128xf32>
    %c3_50 = arith.constant 3 : index
    %c2_51 = arith.constant 2 : index
    %c0_52 = arith.constant 0 : index
    %132 = vector.load %arg1[%c3_50, %c2_51, %c0_52] : memref<5x8x128xf32, #tpu.memory_space<vmem>>, vector<1x1x128xf32>
    %133 = vector.shape_cast %132 : vector<1x1x128xf32> to vector<1x128xf32>
    %134 = vector.extract_strided_slice %114 {offsets = [0, 2], sizes = [8, 1], strides = [1, 1]} : vector<8x128xf32> to vector<8x1xf32>
    %135 = vector.broadcast %134 : vector<8x1xf32> to vector<8x128xf32>
    %136 = vector.broadcast %133 : vector<1x128xf32> to vector<8x128xf32>
    %137 = arith.mulf %135, %136 : vector<8x128xf32>
    %138 = arith.addf %131, %137 : vector<8x128xf32>
    %139 = arith.mulf %138, %138 : vector<8x128xf32>
    %140 = arith.mulf %139, %138 : vector<8x128xf32>
    %cst_53 = arith.constant 5.000000e-01 : f32
    %141 = vector.broadcast %cst_53 : f32 to vector<8x128xf32>
    %142 = arith.mulf %141, %138 : vector<8x128xf32>
    %cst_54 = arith.constant 4.471500e-02 : f32
    %143 = vector.broadcast %cst_54 : f32 to vector<8x128xf32>
    %144 = arith.mulf %143, %140 : vector<8x128xf32>
    %145 = arith.addf %138, %144 : vector<8x128xf32>
    %cst_55 = arith.constant 0.797884583 : f32
    %146 = vector.broadcast %cst_55 : f32 to vector<8x128xf32>
    %147 = arith.mulf %146, %145 : vector<8x128xf32>
    %148 = math.tanh %147 : vector<8x128xf32>
    %cst_56 = arith.constant 1.000000e+00 : f32
    %149 = vector.broadcast %cst_56 : f32 to vector<8x128xf32>
    %150 = arith.addf %149, %148 : vector<8x128xf32>
    %151 = arith.mulf %142, %150 : vector<8x128xf32>
    %152 = arith.addf %114, %151 : vector<8x128xf32>
    %c4 = arith.constant 4 : index
    %c0_57 = arith.constant 0 : index
    %153 = vector.load %arg2[%c4, %c0_57] : memref<5x128xf32, #tpu.memory_space<vmem>>, vector<1x128xf32>
    %154 = vector.shape_cast %153 : vector<1x128xf32> to vector<1x128xf32>
    %155 = vector.broadcast %154 : vector<1x128xf32> to vector<8x128xf32>
    %c4_58 = arith.constant 4 : index
    %c0_59 = arith.constant 0 : index
    %c0_60 = arith.constant 0 : index
    %156 = vector.load %arg1[%c4_58, %c0_59, %c0_60] : memref<5x8x128xf32, #tpu.memory_space<vmem>>, vector<1x1x128xf32>
    %157 = vector.shape_cast %156 : vector<1x1x128xf32> to vector<1x128xf32>
    %158 = vector.extract_strided_slice %152 {offsets = [0, 0], sizes = [8, 1], strides = [1, 1]} : vector<8x128xf32> to vector<8x1xf32>
    %159 = vector.broadcast %158 : vector<8x1xf32> to vector<8x128xf32>
    %160 = vector.broadcast %157 : vector<1x128xf32> to vector<8x128xf32>
    %161 = arith.mulf %159, %160 : vector<8x128xf32>
    %162 = arith.addf %155, %161 : vector<8x128xf32>
    %c4_61 = arith.constant 4 : index
    %c1_62 = arith.constant 1 : index
    %c0_63 = arith.constant 0 : index
    %163 = vector.load %arg1[%c4_61, %c1_62, %c0_63] : memref<5x8x128xf32, #tpu.memory_space<vmem>>, vector<1x1x128xf32>
    %164 = vector.shape_cast %163 : vector<1x1x128xf32> to vector<1x128xf32>
    %165 = vector.extract_strided_slice %152 {offsets = [0, 1], sizes = [8, 1], strides = [1, 1]} : vector<8x128xf32> to vector<8x1xf32>
    %166 = vector.broadcast %165 : vector<8x1xf32> to vector<8x128xf32>
    %167 = vector.broadcast %164 : vector<1x128xf32> to vector<8x128xf32>
    %168 = arith.mulf %166, %167 : vector<8x128xf32>
    %169 = arith.addf %162, %168 : vector<8x128xf32>
    %c4_64 = arith.constant 4 : index
    %c2_65 = arith.constant 2 : index
    %c0_66 = arith.constant 0 : index
    %170 = vector.load %arg1[%c4_64, %c2_65, %c0_66] : memref<5x8x128xf32, #tpu.memory_space<vmem>>, vector<1x1x128xf32>
    %171 = vector.shape_cast %170 : vector<1x1x128xf32> to vector<1x128xf32>
    %172 = vector.extract_strided_slice %152 {offsets = [0, 2], sizes = [8, 1], strides = [1, 1]} : vector<8x128xf32> to vector<8x1xf32>
    %173 = vector.broadcast %172 : vector<8x1xf32> to vector<8x128xf32>
    %174 = vector.broadcast %171 : vector<1x128xf32> to vector<8x128xf32>
    %175 = arith.mulf %173, %174 : vector<8x128xf32>
    %176 = arith.addf %169, %175 : vector<8x128xf32>
    %177 = arith.mulf %176, %176 : vector<8x128xf32>
    %178 = arith.mulf %177, %176 : vector<8x128xf32>
    %cst_67 = arith.constant 5.000000e-01 : f32
    %179 = vector.broadcast %cst_67 : f32 to vector<8x128xf32>
    %180 = arith.mulf %179, %176 : vector<8x128xf32>
    %cst_68 = arith.constant 4.471500e-02 : f32
    %181 = vector.broadcast %cst_68 : f32 to vector<8x128xf32>
    %182 = arith.mulf %181, %178 : vector<8x128xf32>
    %183 = arith.addf %176, %182 : vector<8x128xf32>
    %cst_69 = arith.constant 0.797884583 : f32
    %184 = vector.broadcast %cst_69 : f32 to vector<8x128xf32>
    %185 = arith.mulf %184, %183 : vector<8x128xf32>
    %186 = math.tanh %185 : vector<8x128xf32>
    %cst_70 = arith.constant 1.000000e+00 : f32
    %187 = vector.broadcast %cst_70 : f32 to vector<8x128xf32>
    %188 = arith.addf %187, %186 : vector<8x128xf32>
    %189 = arith.mulf %180, %188 : vector<8x128xf32>
    %c0_71 = arith.constant 0 : index
    %c0_72 = arith.constant 0 : index
    %190 = vector.load %arg3[%c0_71, %c0_72] : memref<8x128xf32, #tpu.memory_space<vmem>>, vector<8x128xf32>
    tpu.vector_store %arg3[%c0_71, %c0_72], %189 {strides = array<i32>} : memref<8x128xf32, #tpu.memory_space<vmem>>, vector<8x128xf32>,
    return
  }
}

</mosaic_0001>

<llo_original>
// kernel: example_deep_nn_forward.1
$region0: #{example_deep_nn_forward.1}
  #allocation0 [shape = 'u32[]', space=smem, size = 0x4, offset = 0x4, fixed_abs, tag = 'smem constant byte address 0x4 - core index']
  #allocation1 [shape = 'u32[144,128]{1,0:T(1,128)}', space=vmem, size = 0x12000, scoped, tag = 'internal scratch']
  %s0 = inlined_call_operand.vmem [shape: f32[8,128], index: 0, kind: input, shape index: {}]
  %s1 = inlined_call_operand.hbm [shape: f32[5,8,128], index: 1, kind: input, shape index: {}]
  %s2 = inlined_call_operand.vmem [shape: f32[5,128], index: 2, kind: input, shape index: {}]
  %s3 = inlined_call_operand.vmem [shape: f32[8,128], index: 3, kind: output, shape index: {}]
  %s4 = sld [smem:[#allocation0]]
  $region26: #{example_deep_nn_forward.1} parent=0
    _
  %s6 = ssub.s32 1, %s4
  %s7 = scalar_select 0, %s6, %s4
  $region1: #{example_deep_nn_forward.1} parent=0
    #allocation2 [shape = 'u8[20480]{0}', space=vmem, size = 0x5000, scoped, tag = 'input window, operand 1, single buffered']
    #allocation3 [shape = 's32[1]{0}', space=sflag, size = 0x4, scoped, tag = 'scoped memory for example_deep_nn_forward.1']
    %8 = vsyncpa [#allocation3], 0
    // Predicated region
    $region2: #{example_deep_nn_forward.1} parent=1 // pred_check
      _
    $region3: #{example_deep_nn_forward.1} parent=1 // pred_check_branch
      %10 = sbr.rel (0) target = $region5
    $region4: #{example_deep_nn_forward.1} parent=1 // pred_region
      _
    $region5: #{example_deep_nn_forward.1} parent=1 // pred_fallthru
      _
    // Predicated region
    $region6: #{example_deep_nn_forward.1} parent=1 // pred_check
      _
    $region7: #{example_deep_nn_forward.1} parent=1 // pred_check_branch
      %12 = sbr.rel (0) target = $region9
    $region8: #{example_deep_nn_forward.1} parent=1 // pred_region
      %s14 = ssub.s32 640, 640
      %15 = vsyncadd [#allocation3], %s14
      %s16 = sshll.u32 [#allocation2], 4
      %s17 = int_to_ptr.vmem [resolvable:$true] %s16
      %22 = dma.hbm_to_vmem [thread:$0]  %s1, 640, %s17, [#allocation3], 128, 128, 8
    $region9: #{example_deep_nn_forward.1} parent=1 // pred_fallthru
      _
    // Predicated region
    $region10: #{example_deep_nn_forward.1} parent=1 // pred_check
      _
    $region11: #{example_deep_nn_forward.1} parent=1 // pred_check_branch
      %24 = sbr.rel (0) target = $region13
    $region12: #{example_deep_nn_forward.1} parent=1 // pred_region
      _
    $region13: #{example_deep_nn_forward.1} parent=1 // pred_fallthru
      _
    // Predicated region
    $region14: #{example_deep_nn_forward.1} parent=1 // pred_check
      _
    $region15: #{example_deep_nn_forward.1} parent=1 // pred_check_branch
      %26 = sbr.rel (0) target = $region17
    $region16: #{example_deep_nn_forward.1} parent=1 // pred_region
      %27 = dma.done [#allocation3], 640
    $region17: #{example_deep_nn_forward.1} parent=1 // pred_fallthru
      _
    %v28 = vld [vmem:[%s0] sm:$0xff]
    %v29 = vld [vmem:[%s2] sm:$0x1]
    %v30 = vlaneseq
    %v31 = vshrl.u32 %v30, 7
    %v32 = vsub.s32 0, %v31
    %v33 = vrot.slane %v29, %v32
    %v34 = vld [vmem:[#allocation2] sm:$0x1]
    %36 = vset.pattern.permute.xlu0 0
    %37 = vperm.xlu0 %36, %v28
    %v38 = vpop.permute.xlu0 %37
    %v40 = vlaneseq
    %v41 = vshrl.u32 %v40, 7
    %v42 = vsub.s32 0, %v41
    %v43 = vrot.slane %v34, %v42
    %v44 = vmul.f32 %v38, %v43
    %v45 = vadd.f32 %v33, %v44
    %v46 = vld [vmem:[#allocation2 + $0x1] sm:$0x1]
    %47 = vset.pattern.permute.xlu0 1
    %48 = vperm.xlu0 %47, %v28
    %v49 = vpop.permute.xlu0 %48
    %v51 = vlaneseq
    %v52 = vshrl.u32 %v51, 7
    %v53 = vsub.s32 0, %v52
    %v54 = vrot.slane %v46, %v53
    %v55 = vmul.f32 %v49, %v54
    %v56 = vadd.f32 %v45, %v55
    %v57 = vld [vmem:[#allocation2 + $0x2] sm:$0x1]
    %58 = vset.pattern.permute.xlu0 2
    %59 = vperm.xlu0 %58, %v28
    %v60 = vpop.permute.xlu0 %59
    %v62 = vlaneseq
    %v63 = vshrl.u32 %v62, 7
    %v64 = vsub.s32 0, %v63
    %v65 = vrot.slane %v57, %v64
    %v66 = vmul.f32 %v60, %v65
    %v67 = vadd.f32 %v56, %v66
    %v68 = vmul.f32 %v67, %v67
    %v69 = vmul.f32 %v68, %v67
    %v70 = vmul.f32 %v67, 0.5
    %v71 = vmul.f32 %v69, 0.044715
    %v72 = vadd.f32 %v67, %v71
    %v73 = vmul.f32 %v72, 0.7978846
    %v74 = vtanh.pop %v73
    %v75 = vadd.f32 %v74, 1.0
    %v76 = vmul.f32 %v70, %v75
    %v77 = vadd.f32 %v28, %v76
    %v78 = vld [vmem:[%s2 + $0x1] sm:$0x1]
    %v79 = vlaneseq
    %v80 = vshrl.u32 %v79, 7
    %v81 = vsub.s32 0, %v80
    %v82 = vrot.slane %v78, %v81
    %s83 = scalar_lea.vmem [#allocation2], 8
    %v84 = vld [vmem:[%s83] sm:$0x1]
    %86 = vset.pattern.permute.xlu0 0
    %87 = vperm.xlu0 %86, %v77
    %v88 = vpop.permute.xlu0 %87
    %v90 = vlaneseq
    %v91 = vshrl.u32 %v90, 7
    %v92 = vsub.s32 0, %v91
    %v93 = vrot.slane %v84, %v92
    %v94 = vmul.f32 %v88, %v93
    %v95 = vadd.f32 %v82, %v94
    %v96 = vld [vmem:[%s83 + $0x1] sm:$0x1]
    %97 = vset.pattern.permute.xlu0 1
    %98 = vperm.xlu0 %97, %v77
    %v99 = vpop.permute.xlu0 %98
    %v101 = vlaneseq
    %v102 = vshrl.u32 %v101, 7
    %v103 = vsub.s32 0, %v102
    %v104 = vrot.slane %v96, %v103
    %v105 = vmul.f32 %v99, %v104
    %v106 = vadd.f32 %v95, %v105
    %v107 = vld [vmem:[%s83 + $0x2] sm:$0x1]
    %108 = vset.pattern.permute.xlu0 2
    %109 = vperm.xlu0 %108, %v77
    %v110 = vpop.permute.xlu0 %109
    %v112 = vlaneseq
    %v113 = vshrl.u32 %v112, 7
    %v114 = vsub.s32 0, %v113
    %v115 = vrot.slane %v107, %v114
    %v116 = vmul.f32 %v110, %v115
    %v117 = vadd.f32 %v106, %v116
    %v118 = vmul.f32 %v117, %v117
    %v119 = vmul.f32 %v118, %v117
    %v120 = vmul.f32 %v117, 0.5
    %v121 = vmul.f32 %v119, 0.044715
    %v122 = vadd.f32 %v117, %v121
    %v123 = vmul.f32 %v122, 0.7978846
    %v124 = vtanh.pop %v123
    %v125 = vadd.f32 %v124, 1.0
    %v126 = vmul.f32 %v120, %v125
    %v127 = vadd.f32 %v77, %v126
    %v128 = vld [vmem:[%s2 + $0x2] sm:$0x1]
    %v129 = vlaneseq
    %v130 = vshrl.u32 %v129, 7
    %v131 = vsub.s32 0, %v130
    %v132 = vrot.slane %v128, %v131
    %s133 = scalar_lea.vmem [#allocation2], 16
    %v134 = vld [vmem:[%s133] sm:$0x1]
    %136 = vset.pattern.permute.xlu0 0
    %137 = vperm.xlu0 %136, %v127
    %v138 = vpop.permute.xlu0 %137
    %v140 = vlaneseq
    %v141 = vshrl.u32 %v140, 7
    %v142 = vsub.s32 0, %v141
    %v143 = vrot.slane %v134, %v142
    %v144 = vmul.f32 %v138, %v143
    %v145 = vadd.f32 %v132, %v144
    %v146 = vld [vmem:[%s133 + $0x1] sm:$0x1]
    %147 = vset.pattern.permute.xlu0 1
    %148 = vperm.xlu0 %147, %v127
    %v149 = vpop.permute.xlu0 %148
    %v151 = vlaneseq
    %v152 = vshrl.u32 %v151, 7
    %v153 = vsub.s32 0, %v152
    %v154 = vrot.slane %v146, %v153
    %v155 = vmul.f32 %v149, %v154
    %v156 = vadd.f32 %v145, %v155
    %v157 = vld [vmem:[%s133 + $0x2] sm:$0x1]
    %158 = vset.pattern.permute.xlu0 2
    %159 = vperm.xlu0 %158, %v127
    %v160 = vpop.permute.xlu0 %159
    %v162 = vlaneseq
    %v163 = vshrl.u32 %v162, 7
    %v164 = vsub.s32 0, %v163
    %v165 = vrot.slane %v157, %v164
    %v166 = vmul.f32 %v160, %v165
    %v167 = vadd.f32 %v156, %v166
    %v168 = vmul.f32 %v167, %v167
    %v169 = vmul.f32 %v168, %v167
    %v170 = vmul.f32 %v167, 0.5
    %v171 = vmul.f32 %v169, 0.044715
    %v172 = vadd.f32 %v167, %v171
    %v173 = vmul.f32 %v172, 0.7978846
    %v174 = vtanh.pop %v173
    %v175 = vadd.f32 %v174, 1.0
    %v176 = vmul.f32 %v170, %v175
    %v177 = vadd.f32 %v127, %v176
    %v178 = vld [vmem:[%s2 + $0x3] sm:$0x1]
    %v179 = vlaneseq
    %v180 = vshrl.u32 %v179, 7
    %v181 = vsub.s32 0, %v180
    %v182 = vrot.slane %v178, %v181
    %s183 = scalar_lea.vmem [#allocation2], 24
    %v184 = vld [vmem:[%s183] sm:$0x1]
    %186 = vset.pattern.permute.xlu0 0
    %187 = vperm.xlu0 %186, %v177
    %v188 = vpop.permute.xlu0 %187
    %v190 = vlaneseq
    %v191 = vshrl.u32 %v190, 7
    %v192 = vsub.s32 0, %v191
    %v193 = vrot.slane %v184, %v192
    %v194 = vmul.f32 %v188, %v193
    %v195 = vadd.f32 %v182, %v194
    %v196 = vld [vmem:[%s183 + $0x1] sm:$0x1]
    %197 = vset.pattern.permute.xlu0 1
    %198 = vperm.xlu0 %197, %v177
    %v199 = vpop.permute.xlu0 %198
    %v201 = vlaneseq
    %v202 = vshrl.u32 %v201, 7
    %v203 = vsub.s32 0, %v202
    %v204 = vrot.slane %v196, %v203
    %v205 = vmul.f32 %v199, %v204
    %v206 = vadd.f32 %v195, %v205
    %v207 = vld [vmem:[%s183 + $0x2] sm:$0x1]
    %208 = vset.pattern.permute.xlu0 2
    %209 = vperm.xlu0 %208, %v177
    %v210 = vpop.permute.xlu0 %209
    %v212 = vlaneseq
    %v213 = vshrl.u32 %v212, 7
    %v214 = vsub.s32 0, %v213
    %v215 = vrot.slane %v207, %v214
    %v216 = vmul.f32 %v210, %v215
    %v217 = vadd.f32 %v206, %v216
    %v218 = vmul.f32 %v217, %v217
    %v219 = vmul.f32 %v218, %v217
    %v220 = vmul.f32 %v217, 0.5
    %v221 = vmul.f32 %v219, 0.044715
    %v222 = vadd.f32 %v217, %v221
    %v223 = vmul.f32 %v222, 0.7978846
    %v224 = vtanh.pop %v223
    %v225 = vadd.f32 %v224, 1.0
    %v226 = vmul.f32 %v220, %v225
    %v227 = vadd.f32 %v177, %v226
    %v228 = vld [vmem:[%s2 + $0x4] sm:$0x1]
    %v229 = vlaneseq
    %v230 = vshrl.u32 %v229, 7
    %v231 = vsub.s32 0, %v230
    %v232 = vrot.slane %v228, %v231
    %s233 = scalar_lea.vmem [#allocation2], 32
    %v234 = vld [vmem:[%s233] sm:$0x1]
    %236 = vset.pattern.permute.xlu0 0
    %237 = vperm.xlu0 %236, %v227
    %v238 = vpop.permute.xlu0 %237
    %v240 = vlaneseq
    %v241 = vshrl.u32 %v240, 7
    %v242 = vsub.s32 0, %v241
    %v243 = vrot.slane %v234, %v242
    %v244 = vmul.f32 %v238, %v243
    %v245 = vadd.f32 %v232, %v244
    %v246 = vld [vmem:[%s233 + $0x1] sm:$0x1]
    %247 = vset.pattern.permute.xlu0 1
    %248 = vperm.xlu0 %247, %v227
    %v249 = vpop.permute.xlu0 %248
    %v251 = vlaneseq
    %v252 = vshrl.u32 %v251, 7
    %v253 = vsub.s32 0, %v252
    %v254 = vrot.slane %v246, %v253
    %v255 = vmul.f32 %v249, %v254
    %v256 = vadd.f32 %v245, %v255
    %v257 = vld [vmem:[%s233 + $0x2] sm:$0x1]
    %258 = vset.pattern.permute.xlu0 2
    %259 = vperm.xlu0 %258, %v227
    %v260 = vpop.permute.xlu0 %259
    %v262 = vlaneseq
    %v263 = vshrl.u32 %v262, 7
    %v264 = vsub.s32 0, %v263
    %v265 = vrot.slane %v257, %v264
    %v266 = vmul.f32 %v260, %v265
    %v267 = vadd.f32 %v256, %v266
    %v268 = vmul.f32 %v267, %v267
    %v269 = vmul.f32 %v268, %v267
    %v270 = vmul.f32 %v267, 0.5
    %v271 = vmul.f32 %v269, 0.044715
    %v272 = vadd.f32 %v267, %v271
    %v273 = vmul.f32 %v272, 0.7978846
    %v274 = vtanh.pop %v273
    %v275 = vadd.f32 %v274, 1.0
    %v276 = vmul.f32 %v270, %v275
    %277 = vst [vmem:[%s3] sm:$0xff] %v276
    // Predicated region
    $region18: #{example_deep_nn_forward.1} parent=1 // pred_check
      _
    $region19: #{example_deep_nn_forward.1} parent=1 // pred_check_branch
      %279 = sbr.rel (0) target = $region21
    $region20: #{example_deep_nn_forward.1} parent=1 // pred_region
      _
    $region21: #{example_deep_nn_forward.1} parent=1 // pred_fallthru
      _
    // Predicated region
    $region22: #{example_deep_nn_forward.1} parent=1 // pred_check
      _
    $region23: #{example_deep_nn_forward.1} parent=1 // pred_check_branch
      %281 = sbr.rel (0) target = $region25
    $region24: #{example_deep_nn_forward.1} parent=1 // pred_region
      _
    $region25: #{example_deep_nn_forward.1} parent=1 // pred_fallthru
      _
    %282 = vsyncpa [#allocation3], 1

</llo_original>
